<compile_context>
chip_gen: v6e
topology: v6e:2x2x1
jax: 0.10.0
libtpu: 0.0.40
codegen_flags: <defaults>
</compile_context>

<pallas_src>
import math

import jax
import jax.numpy as jnp
from jax.experimental import pallas as pl
from jax.experimental.pallas import tpu as pltpu

_GELU_C = math.sqrt(2.0 / math.pi)


def _gelu_tanh(h):
    # 0.5*h*(1+tanh(z)) == h*sigmoid(2z): saves a VALU add+mul per element,
    # transcendental rides the EUP slot.  f32 (v5e has no bf16 VPU/EUP).
    return h * jax.nn.sigmoid((2.0 * _GELU_C) * (h + 0.044715 * (h * h * h)))


# --------- resident-weights kernel: weights DMA'd once, stay in VMEM --------
def mlp_resident_kernel(x_ref, w1_ref, b1_ref, w2_ref, b2_ref, o_ref):
    # x_ref: (tm, E) bf16   w1_ref: (E, H) bf16   b1_ref: (1, H) f32
    # w2_ref: (H, E) bf16   b2_ref: (1, E) f32    o_ref: (tm, E) bf16
    h = jnp.dot(x_ref[...], w1_ref[...], preferred_element_type=jnp.float32)
    h = h + b1_ref[...]
    g = _gelu_tanh(h)
    y = jnp.dot(g.astype(jnp.bfloat16), w2_ref[...],
                preferred_element_type=jnp.float32)
    o_ref[...] = (y + b2_ref[...]).astype(o_ref.dtype)


# --------- H-tiled fallback: hidden axis is a reduction with f32 acc --------
def mlp_htiled_kernel(x_ref, w1_ref, b1_ref, w2_ref, b2_ref, o_ref, acc_ref):
    h_idx = pl.program_id(1)

    @pl.when(h_idx == 0)
    def _():
        acc_ref[...] = jnp.zeros_like(acc_ref)

    h = jnp.dot(x_ref[...], w1_ref[...], preferred_element_type=jnp.float32)
    h = h + b1_ref[...]
    g = _gelu_tanh(h)
    acc_ref[...] += jnp.dot(g.astype(jnp.bfloat16), w2_ref[...],
                            preferred_element_type=jnp.float32)

    @pl.when(h_idx == pl.num_programs(1) - 1)
    def _():
        o_ref[...] = (acc_ref[...] + b2_ref[...]).astype(o_ref.dtype)


# ----------------------------- planning helpers -----------------------------
def _round_up(x, m):
    return ((x + m - 1) // m) * m


def _vmem_limit_bytes():
    """Per-generation VMEM budget (v5e/v6e ~100 MiB, v7x ~56 MiB)."""
    try:
        cap = pltpu.get_tpu_info().vmem_capacity_bytes
    except Exception:
        cap = 64 << 20  # conservative (v7x per-TC physical)
    return max(32 << 20, min(100 << 20, cap - (8 << 20)))


def _pick_tile_m(M, target=1024):
    """Large M tile to amortize weight streaming, but keep >= 2 tiles whenever
    possible so the 'parallel' axis can shard across megacore TCs (v7x)."""
    if M <= 256:
        return M
    half = _round_up(-(-M // 2), 128)
    if half < M:
        return min(target, half)
    return min(target, M)


def _select_plan(M, E, H, vmem_budget):
    usable = int(vmem_budget * 0.85)  # headroom for compiler-internal scratch
    tm = _pick_tile_m(M)

    def resident_bytes(tm_):
        w = 2 * (2 * E * H * 2)                       # W1+W2 bf16, 2x buffered
        io = 2 * (2 * tm_ * E * 2)                    # x + out tiles, 2x bf16
        interm = tm_ * H * 4 + tm_ * H * 2 + tm_ * E * 4   # h f32, g bf16, y f32
        return w + io + interm

    # Preferred: full weight residency (weights read from HBM exactly once).
    tm_res = tm
    while tm_res > 256 and resident_bytes(tm_res) > usable:
        tm_res = max(256, tm_res // 2)
    if resident_bytes(tm_res) <= usable:
        return "resident", tm_res, H

    # Fallback: H-tiled reduction (TILE_H must divide H exactly).
    def htiled_bytes(tm_, th_):
        io = 2 * (2 * tm_ * E * 2)
        w = 2 * (2 * E * th_ * 2)                     # W1 + W2 slices, 2x buffered
        acc = tm_ * E * 4
        interm = tm_ * th_ * 4 + tm_ * th_ * 2
        return io + w + acc + interm

    for th in (2048, 1536, 1280, 1024, 896, 768, 640, 512, 384, 256, 128):
        if th < H and H % th == 0 and htiled_bytes(tm, th) <= usable:
            return "htiled", tm, th
    tm_s = tm
    while tm_s > 256:
        tm_s = max(256, tm_s // 2)
        for th in (1024, 768, 512, 384, 256, 128):
            if th < H and H % th == 0 and htiled_bytes(tm_s, th) <= usable:
                return "htiled", tm_s, th
    return "htiled", min(tm, 256), (128 if H % 128 == 0 else H)


def prepare_mlp_params(w1, b1, w2, b2):
    """One-time conversion of PyTorch-layout Linear params (outside the jit).

    w1: (4E, E), b1: (4E,), w2: (E, 4E), b2: (E,)
    Returns (w1_t (E,4E) bf16, b1 (1,4E) f32, w2_t (4E,E) bf16, b2 (1,E) f32).
    """
    w1_t = jnp.transpose(w1).astype(jnp.bfloat16)
    w2_t = jnp.transpose(w2).astype(jnp.bfloat16)
    b1_2d = b1.astype(jnp.float32).reshape(1, -1)
    b2_2d = b2.astype(jnp.float32).reshape(1, -1)
    return w1_t, b1_2d, w2_t, b2_2d


@jax.jit
def mlp_forward(x, w1_t, b1_2d, w2_t, b2_2d):
    """x: (B, T, E). Returns (B, T, E) bf16 (matches the PyTorch module)."""
    B, T, E = x.shape
    H = w1_t.shape[1]
    M = B * T

    x2 = x.astype(jnp.bfloat16).reshape(M, E)

    vmem_limit = _vmem_limit_bytes()
    mode, TILE_M, TILE_H = _select_plan(M, E, H, vmem_limit)
    num_m = -(-M // TILE_M)  # padded rows of the last x block are benign
                             # (rows independent; OOB output rows dropped)

    if mode == "resident":
        grid = (num_m,)
        in_specs = [
            pl.BlockSpec((TILE_M, E), lambda i: (i, 0)),   # x tile (pipelined)
            pl.BlockSpec((E, H), lambda i: (0, 0)),        # W1: DMA'd once
            pl.BlockSpec((1, H), lambda i: (0, 0)),        # b1: DMA'd once
            pl.BlockSpec((H, E), lambda i: (0, 0)),        # W2: DMA'd once
            pl.BlockSpec((1, E), lambda i: (0, 0)),        # b2: DMA'd once
        ]
        out_specs = pl.BlockSpec((TILE_M, E), lambda i: (i, 0))
        scratch_shapes = []
        kernel = mlp_resident_kernel
        dims = ("parallel",)
        bytes_accessed = 2 * M * E * 2 + 2 * E * H * 2 + H * 4 + E * 4
    else:
        grid = (num_m, H // TILE_H)
        in_specs = [
            pl.BlockSpec((TILE_M, E), lambda i, h: (i, 0)),   # x tile
            pl.BlockSpec((E, TILE_H), lambda i, h: (0, h)),   # W1 slice
            pl.BlockSpec((1, TILE_H), lambda i, h: (0, h)),   # b1 slice
            pl.BlockSpec((TILE_H, E), lambda i, h: (h, 0)),   # W2 slice
            pl.BlockSpec((1, E), lambda i, h: (0, 0)),        # b2
        ]
        out_specs = pl.BlockSpec((TILE_M, E), lambda i, h: (i, 0))
        scratch_shapes = [pltpu.VMEM((TILE_M, E), jnp.float32)]
        kernel = mlp_htiled_kernel
        dims = ("parallel", "arbitrary")
        # weights (and b1) are re-streamed once per M tile under this grid
        bytes_accessed = (2 * M * E * 2
                          + num_m * (2 * E * H * 2 + H * 4)
                          + E * 4)

    cost = pl.CostEstimate(
        flops=4 * M * E * H,            # two matmuls: 2*M*E*H flops each
        transcendentals=M * H,          # one sigmoid per hidden element
        bytes_accessed=bytes_accessed,
    )

    out = pl.pallas_call(
        kernel,
        out_shape=jax.ShapeDtypeStruct((M, E), jnp.bfloat16),
        grid_spec=pltpu.PrefetchScalarGridSpec(
            num_scalar_prefetch=0,
            grid=grid,
            in_specs=in_specs,
            out_specs=out_specs,
            scratch_shapes=scratch_shapes,
        ),
        compiler_params=pltpu.CompilerParams(
            dimension_semantics=dims,
            vmem_limit_bytes=vmem_limit,
        ),
        cost_estimate=cost,
    )(x2, w1_t, b1_2d, w2_t, b2_2d)

    return out.reshape(B, T, E)


def _gelu_tanh_ref(x):
    return 0.5 * x * (1.0 + jnp.tanh(_GELU_C * (x + 0.044715 * x * x * x)))


if __name__ == "__main__":
    # Small config consistent with the module: n_embd=32, hidden=4*32=128.
    # (At these shapes the kernel is padding/overhead dominated; perf
    #  conclusions only transfer at realistic n_embd >= 768.)
    B, T, E = 2, 8, 32
    H = 4 * E

    key = jax.random.PRNGKey(0)
    k_x, k_w1, k_b1, k_w2, k_b2 = jax.random.split(key, 5)

    x = jax.random.normal(k_x, (B, T, E), dtype=jnp.float32)

    # Deterministic synthetic parameters in PyTorch Linear layout, bf16 storage
    # (matches dtype=torch.bfloat16 in the module).
    w1 = (0.02 * jax.random.normal(k_w1, (H, E), dtype=jnp.float32)).astype(jnp.bfloat16)
    b1 = (0.01 * jax.random.normal(k_b1, (H,), dtype=jnp.float32)).astype(jnp.bfloat16)
    w2 = (0.02 / math.sqrt(2.0) * jax.random.normal(k_w2, (E, H), dtype=jnp.float32)).astype(jnp.bfloat16)
    b2 = (0.01 * jax.random.normal(k_b2, (E,), dtype=jnp.float32)).astype(jnp.bfloat16)

    # One-time weight prep (transpose + cast) outside the jitted forward.
    params = prepare_mlp_params(w1, b1, w2, b2)

    y = mlp_forward(x, *params)
    jax.block_until_ready(y)

    assert y.shape == (B, T, E)
    assert y.dtype == jnp.bfloat16

    # Reference in plain JAX (same math: bf16 inputs, f32 accumulation).
    xb = x.astype(jnp.bfloat16).reshape(B * T, E)
    h_ref = jnp.dot(xb, w1.T.astype(jnp.bfloat16),
                    preferred_element_type=jnp.float32) + b1.astype(jnp.float32)
    h_ref = _gelu_tanh_ref(h_ref).astype(jnp.bfloat16)
    y_ref = jnp.dot(h_ref, w2.T.astype(jnp.bfloat16),
                    preferred_element_type=jnp.float32) + b2.astype(jnp.float32)
    y_ref = y_ref.astype(jnp.bfloat16).reshape(B, T, E)

    assert jnp.allclose(y.astype(jnp.float32), y_ref.astype(jnp.float32),
                        atol=2e-2, rtol=2e-2)

    print("KERNEL_OK")
</pallas_src>

<mosaic_0001>
module attributes {stable_mosaic.version = 11 : i64} {
  func.func @mlp_resident_kernel(%arg0: i32, %arg1: memref<16x32xbf16, #tpu.memory_space<vmem>>, %arg2: memref<32x128xbf16, #tpu.memory_space<vmem>>, %arg3: memref<1x128xf32, #tpu.memory_space<vmem>>, %arg4: memref<128x32xbf16, #tpu.memory_space<vmem>>, %arg5: memref<1x32xf32, #tpu.memory_space<vmem>>, %arg6: memref<16x32xbf16, #tpu.memory_space<vmem>>) attributes {dimension_semantics = [#tpu.dimension_semantics<parallel>], iteration_bounds = array<i64: 1>, scalar_prefetch = 0 : i64, scratch_operands = 0 : i64, tpu.core_type = #tpu.core_type<tc>, window_params = [{transform_indices = @transform_0, window_bounds = array<i64: 16, 32>}, {pipeline_mode = #tpu.pipeline_mode<synchronous>, transform_indices = @transform_1, window_bounds = array<i64: 32, 128>}, {pipeline_mode = #tpu.pipeline_mode<synchronous>, transform_indices = @transform_2, window_bounds = array<i64: 1, 128>}, {pipeline_mode = #tpu.pipeline_mode<synchronous>, transform_indices = @transform_3, window_bounds = array<i64: 128, 32>}, {pipeline_mode = #tpu.pipeline_mode<synchronous>, transform_indices = @transform_4, window_bounds = array<i64: 1, 32>}, {transform_indices = @transform_5, window_bounds = array<i64: 16, 32>}]} {
    %c0 = arith.constant 0 : index
    %c0_0 = arith.constant 0 : index
    %0 = vector.load %arg1[%c0, %c0_0] : memref<16x32xbf16, #tpu.memory_space<vmem>>, vector<16x32xbf16>
    %c0_1 = arith.constant 0 : index
    %c0_2 = arith.constant 0 : index
    %1 = vector.load %arg2[%c0_1, %c0_2] : memref<32x128xbf16, #tpu.memory_space<vmem>>, vector<32x128xbf16>
    %cst = arith.constant dense<0.000000e+00> : vector<16x128xf32>
    %2 = tpu.matmul %0, %1, %cst {dimension_numbers = #tpu.dot_dimension_numbers<[1], [0], [0], [1], [0, 0, 1, 1], [], []>} : vector<16x32xbf16>, vector<32x128xbf16>, vector<16x128xf32> -> vector<16x128xf32>
    %c0_3 = arith.constant 0 : index
    %c0_4 = arith.constant 0 : index
    %3 = vector.load %arg3[%c0_3, %c0_4] : memref<1x128xf32, #tpu.memory_space<vmem>>, vector<1x128xf32>
    %4 = vector.broadcast %3 : vector<1x128xf32> to vector<16x128xf32>
    %5 = arith.addf %2, %4 : vector<16x128xf32>
    %6 = arith.mulf %5, %5 : vector<16x128xf32>
    %7 = arith.mulf %6, %5 : vector<16x128xf32>
    %cst_5 = arith.constant 4.471500e-02 : f32
    %8 = vector.broadcast %cst_5 : f32 to vector<16x128xf32>
    %9 = arith.mulf %8, %7 : vector<16x128xf32>
    %10 = arith.addf %5, %9 : vector<16x128xf32>
    %cst_6 = arith.constant 1.59576917 : f32
    %11 = vector.broadcast %cst_6 : f32 to vector<16x128xf32>
    %12 = arith.mulf %11, %10 : vector<16x128xf32>
    %13 = arith.negf %12 : vector<16x128xf32>
    %14 = math.exp %13 : vector<16x128xf32>
    %cst_7 = arith.constant 1.000000e+00 : f32
    %15 = vector.broadcast %cst_7 : f32 to vector<16x128xf32>
    %16 = arith.addf %15, %14 : vector<16x128xf32>
    %17 = arith.divf %15, %16 : vector<16x128xf32>
    %18 = arith.mulf %5, %17 : vector<16x128xf32>
    %19 = arith.truncf %18 : vector<16x128xf32> to vector<16x128xbf16>
    %c0_8 = arith.constant 0 : index
    %c0_9 = arith.constant 0 : index
    %20 = vector.load %arg4[%c0_8, %c0_9] : memref<128x32xbf16, #tpu.memory_space<vmem>>, vector<128x32xbf16>
    %cst_10 = arith.constant dense<0.000000e+00> : vector<16x32xf32>
    %21 = tpu.matmul %19, %20, %cst_10 {dimension_numbers = #tpu.dot_dimension_numbers<[1], [0], [0], [1], [0, 0, 1, 1], [], []>} : vector<16x128xbf16>, vector<128x32xbf16>, vector<16x32xf32> -> vector<16x32xf32>
    %c0_11 = arith.constant 0 : index
    %c0_12 = arith.constant 0 : index
    %22 = vector.load %arg5[%c0_11, %c0_12] : memref<1x32xf32, #tpu.memory_space<vmem>>, vector<1x32xf32>
    %23 = vector.broadcast %22 : vector<1x32xf32> to vector<16x32xf32>
    %24 = arith.addf %21, %23 : vector<16x32xf32>
    %25 = arith.truncf %24 : vector<16x32xf32> to vector<16x32xbf16>
    %c0_13 = arith.constant 0 : index
    %c0_14 = arith.constant 0 : index
    %26 = vector.load %arg6[%c0_13, %c0_14] : memref<16x32xbf16, #tpu.memory_space<vmem>>, vector<16x32xbf16>
    tpu.vector_store %arg6[%c0_13, %c0_14], %25 {strides = array<i32>} : memref<16x32xbf16, #tpu.memory_space<vmem>>, vector<16x32xbf16>,
    return
  }
  func.func @transform_0(%arg0: i32) -> (i32, i32) {
    %c0_i32 = arith.constant 0 : i32
    %c0_i32_0 = arith.constant 0 : i32
    return %arg0, %c0_i32 : i32, i32
  }
  func.func @transform_1(%arg0: i32) -> (i32, i32) {
    %c0_i32 = arith.constant 0 : i32
    %c0_i32_0 = arith.constant 0 : i32
    %c0_i32_1 = arith.constant 0 : i32
    return %c0_i32, %c0_i32_0 : i32, i32
  }
  func.func @transform_2(%arg0: i32) -> (i32, i32) {
    %c0_i32 = arith.constant 0 : i32
    %c0_i32_0 = arith.constant 0 : i32
    %c0_i32_1 = arith.constant 0 : i32
    return %c0_i32, %c0_i32_0 : i32, i32
  }
  func.func @transform_3(%arg0: i32) -> (i32, i32) {
    %c0_i32 = arith.constant 0 : i32
    %c0_i32_0 = arith.constant 0 : i32
    %c0_i32_1 = arith.constant 0 : i32
    return %c0_i32, %c0_i32_0 : i32, i32
  }
  func.func @transform_4(%arg0: i32) -> (i32, i32) {
    %c0_i32 = arith.constant 0 : i32
    %c0_i32_0 = arith.constant 0 : i32
    %c0_i32_1 = arith.constant 0 : i32
    return %c0_i32, %c0_i32_0 : i32, i32
  }
  func.func @transform_5(%arg0: i32) -> (i32, i32) {
    %c0_i32 = arith.constant 0 : i32
    %c0_i32_0 = arith.constant 0 : i32
    return %arg0, %c0_i32 : i32, i32
  }
}

</mosaic_0001>

<llo_original>
// kernel: mlp_forward.1
$region0: #{mlp_forward.1}
  #allocation0 [shape = 'u32[]', space=smem, size = 0x4, offset = 0x4, fixed_abs, tag = 'smem constant byte address 0x4 - core index']
  #allocation1 [shape = 'u32[144,128]{1,0:T(1,128)}', space=vmem, size = 0x12000, scoped, tag = 'internal scratch']
  %s0 = inlined_call_operand.vmem [shape: bf16[16,32], index: 0, kind: input, shape index: {}]
  %s1 = inlined_call_operand.vmem [shape: bf16[32,128], index: 1, kind: input, shape index: {}]
  %s2 = inlined_call_operand.vmem [shape: f32[1,128], index: 2, kind: input, shape index: {}]
  %s3 = inlined_call_operand.vmem [shape: bf16[128,32], index: 3, kind: input, shape index: {}]
  %s4 = inlined_call_operand.vmem [shape: f32[1,32], index: 4, kind: input, shape index: {}]
  %s5 = inlined_call_operand.hbm [shape: bf16[16,32], index: 5, kind: output, shape index: {}]
  %s6 = sld [smem:[#allocation0]]
  $region30: #{mlp_forward.1} parent=0
    _
  %s8 = ssub.s32 1, %s6
  %s9 = scalar_select 0, %s8, %s6
  $region1: #{mlp_forward.1} parent=0
    #allocation2 [shape = 'u8[4096]{0}', space=vmem, size = 0x1000, scoped, tag = 'output window, operand 0, single buffered']
    #allocation3 [shape = 's32[1]{0}', space=sflag, size = 0x4, scoped, tag = 'scoped memory for mlp_forward.1']
    %10 = vsyncpa [#allocation3], 0
    // Predicated region
    $region2: #{mlp_forward.1} parent=1 // pred_check
      _
    $region3: #{mlp_forward.1} parent=1 // pred_check_branch
      %12 = sbr.rel (0) target = $region5
    $region4: #{mlp_forward.1} parent=1 // pred_region
      _
    $region5: #{mlp_forward.1} parent=1 // pred_fallthru
      _
    // Predicated region
    $region6: #{mlp_forward.1} parent=1 // pred_check
      _
    $region7: #{mlp_forward.1} parent=1 // pred_check_branch
      %14 = sbr.rel (0) target = $region9
    $region8: #{mlp_forward.1} parent=1 // pred_region
      _
    $region9: #{mlp_forward.1} parent=1 // pred_fallthru
      _
    // Predicated region
    $region10: #{mlp_forward.1} parent=1 // pred_check
      _
    $region11: #{mlp_forward.1} parent=1 // pred_check_branch
      %16 = sbr.rel (0) target = $region13
    $region12: #{mlp_forward.1} parent=1 // pred_region
      _
    $region13: #{mlp_forward.1} parent=1 // pred_fallthru
      _
    // Predicated region
    $region14: #{mlp_forward.1} parent=1 // pred_check
      _
    $region15: #{mlp_forward.1} parent=1 // pred_check_branch
      %18 = sbr.rel (0) target = $region17
    $region16: #{mlp_forward.1} parent=1 // pred_region
      _
    $region17: #{mlp_forward.1} parent=1 // pred_fallthru
      _
    // Predicated region
    $region18: #{mlp_forward.1} parent=1 // pred_check
      _
    $region19: #{mlp_forward.1} parent=1 // pred_check_branch
      %20 = sbr.rel (0) target = $region21
    $region20: #{mlp_forward.1} parent=1 // pred_region
      _
    $region21: #{mlp_forward.1} parent=1 // pred_fallthru
      _
    %v22 = vld [vmem:[%s0] sm:$0xf]
    %v23 = vld [vmem:[%s0 + $0x4] sm:$0xf]
    %v24 = vld [vmem:[%s1] sm:$0xf]
    %v25 = vld [vmem:[%s1 + $0x4] sm:$0xf]
    %v26 = vld [vmem:[%s1 + $0x8] sm:$0xf]
    %v27 = vld [vmem:[%s1 + $0xc] sm:$0xf]
    %v28 = vld [vmem:[%s2] sm:$0x1]
    %v30 = vlaneseq
    %v31 = vshrl.u32 %v30, 7
    %v32 = vsub.s32 0, %v31
    %v33 = vrot.slane %v28, %v32
    %v37 = vunpack.c.l.b16 %v22
    %v38 = vunpack.c.l.b16 %v23
    %v39 = vpack.c.b16 %v38, %v37
    %v44 = vunpack.c.l.b16 %v24
    %v45 = vunpack.c.l.b16 %v25
    %v46 = vunpack.c.l.b16 %v26
    %v47 = vunpack.c.l.b16 %v27
    %v48 = vpack.c.b16 %v45, %v44
    %v49 = vpack.c.b16 %v47, %v46
    %vm52 = vcmask 261120
    %v54 = vsel %vm52, %v39, 0
    %56 = vmatprep.subr.bf16.mxu0 0
    %57 = vmatpush1.bf16.msra.mxu0 0
    %58 = vmatprep.subr.bf16.mxu0 0
    %59 = vmatpush1.bf16.msra.mxu0 0
    %60 = vmatprep.subr.bf16.mxu0 0
    %61 = vmatpush1.bf16.msra.mxu0 0
    %62 = vmatprep.subr.bf16.mxu0 0
    %63 = vmatpush1.bf16.msra.mxu0 0
    %64 = vmatprep.subr.bf16.mxu0 0
    %65 = vmatpush1.bf16.msra.mxu0 0
    %66 = vmatprep.subr.bf16.mxu0 0
    %67 = vmatpush1.bf16.msra.mxu0 0
    %68 = vmatprep.subr.bf16.mxu0 0
    %69 = vmatpush1.bf16.msra.mxu0 %v49
    %70 = vmatprep.subr.bf16.mxu0 0
    %71 = vmatpush1.bf16.msra.mxu0 %v48
    %72 = vmatprep.subr.bf16.mxu0 0
    %73 = vmatpush2.bf16.msra.mxu0 0
    %74 = vmatprep.subr.bf16.mxu0 0
    %75 = vmatpush2.bf16.msra.mxu0 0
    %76 = vmatprep.subr.bf16.mxu0 0
    %77 = vmatpush2.bf16.msra.mxu0 0
    %78 = vmatprep.subr.bf16.mxu0 0
    %79 = vmatpush2.bf16.msra.mxu0 0
    %80 = vmatprep.subr.bf16.mxu0 0
    %81 = vmatpush2.bf16.msra.mxu0 0
    %82 = vmatprep.subr.bf16.mxu0 0
    %83 = vmatpush2.bf16.msra.mxu0 0
    %84 = vmatprep.subr.bf16.mxu0 0
    %85 = vmatpush2.bf16.msra.mxu0 0
    %86 = vmatprep.subr.bf16.mxu0 0
    %87 = vmatpush2.bf16.msra.mxu0 0
    %88 = vmatprep.mubr.bf16.mxu0 0
    %89 = vmatmul.mubr.bf16.gmra.mxu0 %v54
    %v90 = vpop.f32.mrf.mxu0
    %v91 = vadd.f32 %v33, %v90
    %v92 = vpop.f32.mrf.mxu0
    %v93 = vpop.f32.mrf.mxu0
    %v94 = vadd.f32 %v33, %v93
    %v95 = vpop.f32.mrf.mxu0
    %96 = vdwg.mxu0
    %v97 = vmul.f32 %v91, %v91
    %v98 = vmul.f32 %v94, %v94
    %v99 = vmul.f32 %v97, %v91
    %v100 = vmul.f32 %v98, %v94
    %v101 = vmul.f32 %v99, 0.044715
    %v102 = vmul.f32 %v100, 0.044715
    %v103 = vadd.f32 %v91, %v101
    %v104 = vadd.f32 %v94, %v102
    %v105 = vmul.f32 %v103, 1.5957692
    %v106 = vmul.f32 %v104, 1.5957692
    %v107 = vxor.u32 %v105, 2147483648
    %v108 = vxor.u32 %v106, 2147483648
    %v109 = vmul.f32 %v107, 1.442695
    %v110 = vpow.pop %v109
    %v111 = vmul.f32 %v108, 1.442695
    %v112 = vpow.pop %v111
    %v113 = vadd.f32 %v110, 1.0
    %v114 = vadd.f32 %v112, 1.0
    %v115 = vrcp.pop %v113
    %v116 = vmul.f32 1.0, %v115
    %v117 = vrcp.pop %v114
    %v118 = vmul.f32 1.0, %v117
    %v119 = vmul.f32 %v91, %v116
    %v120 = vmul.f32 %v94, %v118
    %v121 = vpack.c.bf16 %v120, %v119
    %v122 = vld [vmem:[%s3] sm:$0xf]
    %v123 = vld [vmem:[%s3 + $0x4] sm:$0xf]
    %v124 = vld [vmem:[%s3 + $0x8] sm:$0xf]
    %v125 = vld [vmem:[%s3 + $0xc] sm:$0xf]
    %v126 = vld [vmem:[%s3 + $0x10] sm:$0xf]
    %v127 = vld [vmem:[%s3 + $0x14] sm:$0xf]
    %v128 = vld [vmem:[%s3 + $0x18] sm:$0xf]
    %v129 = vld [vmem:[%s3 + $0x1c] sm:$0xf]
    %v130 = vld [vmem:[%s3 + $0x20] sm:$0xf]
    %v131 = vld [vmem:[%s3 + $0x24] sm:$0xf]
    %v132 = vld [vmem:[%s3 + $0x28] sm:$0xf]
    %v133 = vld [vmem:[%s3 + $0x2c] sm:$0xf]
    %v134 = vld [vmem:[%s3 + $0x30] sm:$0xf]
    %v135 = vld [vmem:[%s3 + $0x34] sm:$0xf]
    %v136 = vld [vmem:[%s3 + $0x38] sm:$0xf]
    %v137 = vld [vmem:[%s3 + $0x3c] sm:$0xf]
    %v138 = vld [vmem:[%s4] sm:$0x1]
    %v140 = vlaneseq
    %v141 = vshrl.u32 %v140, 7
    %v142 = vsub.s32 0, %v141
    %v143 = vrot.slane %v138, %v142
    %v161 = vunpack.c.l.b16 %v122
    %v162 = vunpack.c.l.b16 %v123
    %v163 = vunpack.c.l.b16 %v124
    %v164 = vunpack.c.l.b16 %v125
    %v165 = vunpack.c.l.b16 %v126
    %v166 = vunpack.c.l.b16 %v127
    %v167 = vunpack.c.l.b16 %v128
    %v168 = vunpack.c.l.b16 %v129
    %v169 = vunpack.c.l.b16 %v130
    %v170 = vunpack.c.l.b16 %v131
    %v171 = vunpack.c.l.b16 %v132
    %v172 = vunpack.c.l.b16 %v133
    %v173 = vunpack.c.l.b16 %v134
    %v174 = vunpack.c.l.b16 %v135
    %v175 = vunpack.c.l.b16 %v136
    %v176 = vunpack.c.l.b16 %v137
    %v177 = vpack.c.b16 %v162, %v161
    %v178 = vpack.c.b16 %v164, %v163
    %v179 = vpack.c.b16 %v166, %v165
    %v180 = vpack.c.b16 %v168, %v167
    %v181 = vpack.c.b16 %v170, %v169
    %v182 = vpack.c.b16 %v172, %v171
    %v183 = vpack.c.b16 %v174, %v173
    %v184 = vpack.c.b16 %v176, %v175
    %193 = vmatprep.subr.bf16.mxu0 0
    %194 = vmatpush1.bf16.msra.mxu0 %v184
    %195 = vmatprep.subr.bf16.mxu0 0
    %196 = vmatpush1.bf16.msra.mxu0 %v183
    %197 = vmatprep.subr.bf16.mxu0 0
    %198 = vmatpush1.bf16.msra.mxu0 %v182
    %199 = vmatprep.subr.bf16.mxu0 0
    %200 = vmatpush1.bf16.msra.mxu0 %v181
    %201 = vmatprep.subr.bf16.mxu0 0
    %202 = vmatpush1.bf16.msra.mxu0 %v180
    %203 = vmatprep.subr.bf16.mxu0 0
    %204 = vmatpush1.bf16.msra.mxu0 %v179
    %205 = vmatprep.subr.bf16.mxu0 0
    %206 = vmatpush1.bf16.msra.mxu0 %v178
    %207 = vmatprep.subr.bf16.mxu0 0
    %208 = vmatpush1.bf16.msra.mxu0 %v177
    %209 = vmatprep.subr.bf16.mxu0 0
    %210 = vmatpush2.bf16.msra.mxu0 0
    %211 = vmatprep.subr.bf16.mxu0 0
    %212 = vmatpush2.bf16.msra.mxu0 0
    %213 = vmatprep.subr.bf16.mxu0 0
    %214 = vmatpush2.bf16.msra.mxu0 0
    %215 = vmatprep.subr.bf16.mxu0 0
    %216 = vmatpush2.bf16.msra.mxu0 0
    %217 = vmatprep.subr.bf16.mxu0 0
    %218 = vmatpush2.bf16.msra.mxu0 0
    %219 = vmatprep.subr.bf16.mxu0 0
    %220 = vmatpush2.bf16.msra.mxu0 0
    %221 = vmatprep.subr.bf16.mxu0 0
    %222 = vmatpush2.bf16.msra.mxu0 0
    %223 = vmatprep.subr.bf16.mxu0 0
    %224 = vmatpush2.bf16.msra.mxu0 0
    %225 = vmatprep.mubr.bf16.mxu0 0
    %226 = vmatmul.mubr.bf16.gmra.mxu0 %v121
    %v227 = vpop.f32.mrf.mxu0
    %v228 = vadd.f32 %v143, %v227
    %v229 = vpop.f32.mrf.mxu0
    %v230 = vpop.f32.mrf.mxu0
    %v231 = vadd.f32 %v143, %v230
    %v232 = vpop.f32.mrf.mxu0
    %233 = vdwg.mxu0
    %v234 = vpack.c.bf16 %v231, %v228
    %v236 = vunpack.c.l.b16 %v234
    %v237 = vunpack.c.h.b16 %v234
    %v238 = vpack.c.b16 %v236, %v236
    %v239 = vpack.c.b16 %v237, %v237
    %vm242 = vcmask 257024
    %243 = vst.msk [vmem:[#allocation2] sm:$0xf] %vm242, %v238
    %244 = vst.msk [vmem:[#allocation2 + $0x4] sm:$0xf] %vm242, %v239
    // Predicated region
    $region22: #{mlp_forward.1} parent=1 // pred_check
      _
    $region23: #{mlp_forward.1} parent=1 // pred_check_branch
      %246 = sbr.rel (0) target = $region25
    $region24: #{mlp_forward.1} parent=1 // pred_region
      %s248 = ssub.s32 128, 128
      %249 = vsyncadd [#allocation3], %s248
      %s250 = sshll.u32 [#allocation2], 4
      %s251 = int_to_ptr.vmem [resolvable:$true] %s250
      %256 = dma.vmem_to_hbm [thread:$0]  %s251, 128, %s5, [#allocation3], 64, 64, 4
    $region25: #{mlp_forward.1} parent=1 // pred_fallthru
      _
    // Predicated region
    $region26: #{mlp_forward.1} parent=1 // pred_check
      _
    $region27: #{mlp_forward.1} parent=1 // pred_check_branch
      %258 = sbr.rel (0) target = $region29
    $region28: #{mlp_forward.1} parent=1 // pred_region
      %259 = dma.done [#allocation3], 128
    $region29: #{mlp_forward.1} parent=1 // pred_fallthru
      _
    %260 = vsyncpa [#allocation3], 1

</llo_original>
